<compile_context>
chip_gen: v6e
topology: v6e:2x2x1
jax: 0.10.0
libtpu: 0.0.40
codegen_flags: <defaults>
</compile_context>

<pallas_src>
import functools

import jax
import jax.numpy as jnp
from jax.experimental import pallas as pl
from jax.experimental.pallas import tpu as pltpu


def _round_up(n, m):
    return ((n + m - 1) // m) * m


def _cdiv(a, b):
    return (a + b - 1) // b


def _mlp_kernel(x_ref, w1_ref, b1_ref, w2_ref, b2_ref, o_ref, *, act_dtype):
    # fc1 on the MXU; x is cast to the (bf16) weight dtype on the fly so the
    # wrapper never materialises a padded/cast copy of the batch in HBM.
    x = x_ref[...].astype(w1_ref.dtype)
    h = jnp.dot(x, w1_ref[...], preferred_element_type=jnp.float32)
    # Bias + sigmoid.  sigmoid(z) == 0.5*tanh(0.5*z) + 0.5 -> single EUP tanh
    # instead of exp + exact divide.  act_dtype is f32 by default (portable);
    # on v6e/v7x callers may pass bf16 to halve VALU/EUP work.
    h = h.astype(act_dtype) + b1_ref[...].astype(act_dtype)
    h = jnp.tanh(h * 0.5) * 0.5 + 0.5
    # fc2 on the MXU, f32 accumulation, f32 bias.
    y = jnp.dot(h.astype(w2_ref.dtype), w2_ref[...],
                preferred_element_type=jnp.float32)
    y = y + b2_ref[...]
    o_ref[...] = y.astype(o_ref.dtype)


def _choose_tile_m(batch, tile_m):
    """Batch tile size: big tiles for HBM-roofline efficiency, >=2 tiles for
    v7x megacore, no dead-row padding (ragged last tile is masked)."""
    b8 = _round_up(max(batch, 1), 8)
    if b8 <= 256:
        return b8                       # tiny batch: one full-extent tile
    # Keep at least 2 tiles so the 'parallel' axis feeds both v7x TensorCores.
    half = _round_up(_cdiv(b8, 2), 256)
    return max(8, min(_round_up(tile_m, 8), half))


def prepare_params(w1, b1, w2, b2, *, compute_dtype=jnp.bfloat16):
    """One-time parameter prep (cast/reshape) so repeated forward calls don't
    re-run the cast XLA ops; the re-casts inside network_forward then become
    no-ops."""
    return (w1.astype(compute_dtype),
            b1.reshape(1, -1).astype(jnp.float32),
            w2.astype(compute_dtype),
            b2.reshape(1, -1).astype(jnp.float32))


@functools.partial(
    jax.jit,
    static_argnames=("compute_dtype", "activation_dtype", "out_dtype",
                     "tile_m"))
def network_forward(x, w1, b1, w2, b2, *,
                    compute_dtype=jnp.bfloat16,
                    activation_dtype=jnp.float32,
                    out_dtype=None,
                    tile_m=512):
    """y = sigmoid(x @ w1 + b1) @ w2 + b2  (torch `network.forward`).

    x: (B, Din) — streamed to the kernel unpadded & uncast.
    w1: (Din, Dh) = fc1.weight.T    b1: (Dh,) or (1, Dh)
    w2: (Dh, Dout) = fc2.weight.T   b2: (Dout,) or (1, Dout)
    """
    B, Din = x.shape
    Dh = w1.shape[1]
    Dout = w2.shape[1]
    out_dtype = x.dtype if out_dtype is None else out_dtype

    # Cheap prep (no-ops if prepare_params() was used; otherwise fused by jit).
    w1c = w1.astype(compute_dtype)
    w2c = w2.astype(compute_dtype)
    b1r = b1.reshape(1, Dh).astype(jnp.float32)
    b2r = b2.reshape(1, Dout).astype(jnp.float32)

    tm = _choose_tile_m(B, tile_m)
    num_tiles = _cdiv(B, tm)

    kernel = functools.partial(_mlp_kernel, act_dtype=activation_dtype)

    return pl.pallas_call(
        kernel,
        out_shape=jax.ShapeDtypeStruct((B, Dout), out_dtype),
        grid_spec=pltpu.PrefetchScalarGridSpec(
            num_scalar_prefetch=0,
            grid=(num_tiles,),
            in_specs=[
                # x tiles stream through the auto-pipeline; Din is the full
                # last dim (legal even when < 128), so no wrapper-side pad.
                pl.BlockSpec((tm, Din), lambda i: (i, 0)),
                # Weights / biases stay VMEM-resident across all tiles.
                pl.BlockSpec((Din, Dh), lambda i: (0, 0)),
                pl.BlockSpec((1, Dh), lambda i: (0, 0)),
                pl.BlockSpec((Dh, Dout), lambda i: (0, 0)),
                pl.BlockSpec((1, Dout), lambda i: (0, 0)),
            ],
            # Unpadded (B, Dout) output: far fewer output HBM bytes than a
            # 128-lane-padded slab; ragged last tile is masked by Pallas.
            out_specs=pl.BlockSpec((tm, Dout), lambda i: (i, 0)),
        ),
        compiler_params=pltpu.CompilerParams(
            dimension_semantics=("parallel",)),
    )(x, w1c, b1r, w2c, b2r)


def init_params(key, dim_input, dim_hidden, dim_output, dtype=jnp.float32):
    # Deterministic init mimicking nn.Linear's uniform(-1/sqrt(fan_in), +...).
    k1, k2, k3, k4 = jax.random.split(key, 4)
    bound1 = 1.0 / (dim_input ** 0.5)
    bound2 = 1.0 / (dim_hidden ** 0.5)
    w1 = jax.random.uniform(k1, (dim_input, dim_hidden), dtype,
                            minval=-bound1, maxval=bound1)
    b1 = jax.random.uniform(k2, (dim_hidden,), dtype,
                            minval=-bound1, maxval=bound1)
    w2 = jax.random.uniform(k3, (dim_hidden, dim_output), dtype,
                            minval=-bound2, maxval=bound2)
    b2 = jax.random.uniform(k4, (dim_output,), dtype,
                            minval=-bound2, maxval=bound2)
    return w1, b1, w2, b2


def _ref_forward(x, w1, b1, w2, b2, *, compute_dtype=jnp.bfloat16,
                 activation_dtype=jnp.float32):
    # Pure-JAX reference that mirrors the kernel's compute recipe exactly.
    h = jnp.dot(x.astype(compute_dtype), w1.astype(compute_dtype),
                preferred_element_type=jnp.float32)
    h = h.astype(activation_dtype) + b1.reshape(1, -1).astype(activation_dtype)
    h = jnp.tanh(h * 0.5) * 0.5 + 0.5
    y = jnp.dot(h.astype(compute_dtype), w2.astype(compute_dtype),
                preferred_element_type=jnp.float32)
    y = y + b2.reshape(1, -1).astype(jnp.float32)
    return y.astype(x.dtype)


if __name__ == "__main__":
    # Small shapes consistent with the module (a Linear-sigmoid-Linear MLP).
    batch, dim_input, dim_hidden, dim_output = 8, 64, 32, 10

    key = jax.random.PRNGKey(0)
    kx, kp = jax.random.split(key)
    x = jax.random.normal(kx, (batch, dim_input), jnp.float32)
    w1, b1, w2, b2 = init_params(kp, dim_input, dim_hidden, dim_output)

    out = jax.block_until_ready(network_forward(x, w1, b1, w2, b2))
    assert out.shape == (batch, dim_output)
    assert out.dtype == x.dtype

    # Tight check vs. a reference using the same bf16/f32 compute recipe.
    ref = _ref_forward(x, w1, b1, w2, b2)
    assert jnp.allclose(out, ref, atol=5e-3, rtol=5e-3)

    # Loose sanity check vs. the pure f32 reference (bf16 quantization noise).
    ref_f32 = jax.nn.sigmoid(x @ w1 + b1.reshape(1, -1)) @ w2 + b2.reshape(1, -1)
    assert jnp.allclose(out, ref_f32, atol=1e-1, rtol=1e-1)

    # Larger, ragged batch: exercises the >=2-tile 'parallel' grid (512-row
    # tiles) and the masked partial last tile (516 rows -> 512 + 4), plus the
    # hoisted parameter prep.
    params = prepare_params(w1, b1, w2, b2)
    xb = jax.random.normal(kx, (516, dim_input), jnp.float32)
    outb = jax.block_until_ready(network_forward(xb, *params))
    assert outb.shape == (516, dim_output)
    assert jnp.allclose(outb, _ref_forward(xb, w1, b1, w2, b2),
                        atol=5e-3, rtol=5e-3)

    print("KERNEL_OK")
</pallas_src>

<mosaic_0001>
module attributes {stable_mosaic.version = 11 : i64} {
  func.func @_mlp_kernel(%arg0: i32, %arg1: memref<8x64xf32, #tpu.memory_space<vmem>>, %arg2: memref<64x32xbf16, #tpu.memory_space<vmem>>, %arg3: memref<1x32xf32, #tpu.memory_space<vmem>>, %arg4: memref<32x10xbf16, #tpu.memory_space<vmem>>, %arg5: memref<1x10xf32, #tpu.memory_space<vmem>>, %arg6: memref<8x10xf32, #tpu.memory_space<vmem>>) attributes {dimension_semantics = [#tpu.dimension_semantics<parallel>], iteration_bounds = array<i64: 1>, scalar_prefetch = 0 : i64, scratch_operands = 0 : i64, tpu.core_type = #tpu.core_type<tc>, window_params = [{transform_indices = @transform_0, window_bounds = array<i64: 8, 64>}, {pipeline_mode = #tpu.pipeline_mode<synchronous>, transform_indices = @transform_1, window_bounds = array<i64: 64, 32>}, {pipeline_mode = #tpu.pipeline_mode<synchronous>, transform_indices = @transform_2, window_bounds = array<i64: 1, 32>}, {pipeline_mode = #tpu.pipeline_mode<synchronous>, transform_indices = @transform_3, window_bounds = array<i64: 32, 10>}, {pipeline_mode = #tpu.pipeline_mode<synchronous>, transform_indices = @transform_4, window_bounds = array<i64: 1, 10>}, {transform_indices = @transform_5, window_bounds = array<i64: 8, 10>}]} {
    %c0 = arith.constant 0 : index
    %c0_0 = arith.constant 0 : index
    %0 = vector.load %arg1[%c0, %c0_0] : memref<8x64xf32, #tpu.memory_space<vmem>>, vector<8x64xf32>
    %1 = arith.truncf %0 : vector<8x64xf32> to vector<8x64xbf16>
    %c0_1 = arith.constant 0 : index
    %c0_2 = arith.constant 0 : index
    %2 = vector.load %arg2[%c0_1, %c0_2] : memref<64x32xbf16, #tpu.memory_space<vmem>>, vector<64x32xbf16>
    %cst = arith.constant dense<0.000000e+00> : vector<8x32xf32>
    %3 = tpu.matmul %1, %2, %cst {dimension_numbers = #tpu.dot_dimension_numbers<[1], [0], [0], [1], [0, 0, 1, 1], [], []>} : vector<8x64xbf16>, vector<64x32xbf16>, vector<8x32xf32> -> vector<8x32xf32>
    %c0_3 = arith.constant 0 : index
    %c0_4 = arith.constant 0 : index
    %4 = vector.load %arg3[%c0_3, %c0_4] : memref<1x32xf32, #tpu.memory_space<vmem>>, vector<1x32xf32>
    %5 = vector.broadcast %4 : vector<1x32xf32> to vector<8x32xf32>
    %6 = arith.addf %3, %5 : vector<8x32xf32>
    %cst_5 = arith.constant 5.000000e-01 : f32
    %7 = vector.broadcast %cst_5 : f32 to vector<8x32xf32>
    %8 = arith.mulf %6, %7 : vector<8x32xf32>
    %9 = math.tanh %8 : vector<8x32xf32>
    %cst_6 = arith.constant 5.000000e-01 : f32
    %10 = vector.broadcast %cst_6 : f32 to vector<8x32xf32>
    %11 = arith.mulf %9, %10 : vector<8x32xf32>
    %cst_7 = arith.constant 5.000000e-01 : f32
    %12 = vector.broadcast %cst_7 : f32 to vector<8x32xf32>
    %13 = arith.addf %11, %12 : vector<8x32xf32>
    %14 = arith.truncf %13 : vector<8x32xf32> to vector<8x32xbf16>
    %c0_8 = arith.constant 0 : index
    %c0_9 = arith.constant 0 : index
    %15 = vector.load %arg4[%c0_8, %c0_9] : memref<32x10xbf16, #tpu.memory_space<vmem>>, vector<32x10xbf16>
    %cst_10 = arith.constant dense<0.000000e+00> : vector<8x10xf32>
    %16 = tpu.matmul %14, %15, %cst_10 {dimension_numbers = #tpu.dot_dimension_numbers<[1], [0], [0], [1], [0, 0, 1, 1], [], []>} : vector<8x32xbf16>, vector<32x10xbf16>, vector<8x10xf32> -> vector<8x10xf32>
    %c0_11 = arith.constant 0 : index
    %c0_12 = arith.constant 0 : index
    %17 = vector.load %arg5[%c0_11, %c0_12] : memref<1x10xf32, #tpu.memory_space<vmem>>, vector<1x10xf32>
    %18 = vector.broadcast %17 : vector<1x10xf32> to vector<8x10xf32>
    %19 = arith.addf %16, %18 : vector<8x10xf32>
    %c0_13 = arith.constant 0 : index
    %c0_14 = arith.constant 0 : index
    %20 = vector.load %arg6[%c0_13, %c0_14] : memref<8x10xf32, #tpu.memory_space<vmem>>, vector<8x10xf32>
    tpu.vector_store %arg6[%c0_13, %c0_14], %19 {strides = array<i32>} : memref<8x10xf32, #tpu.memory_space<vmem>>, vector<8x10xf32>,
    return
  }
  func.func @transform_0(%arg0: i32) -> (i32, i32) {
    %c0_i32 = arith.constant 0 : i32
    %c0_i32_0 = arith.constant 0 : i32
    return %arg0, %c0_i32 : i32, i32
  }
  func.func @transform_1(%arg0: i32) -> (i32, i32) {
    %c0_i32 = arith.constant 0 : i32
    %c0_i32_0 = arith.constant 0 : i32
    %c0_i32_1 = arith.constant 0 : i32
    return %c0_i32, %c0_i32_0 : i32, i32
  }
  func.func @transform_2(%arg0: i32) -> (i32, i32) {
    %c0_i32 = arith.constant 0 : i32
    %c0_i32_0 = arith.constant 0 : i32
    %c0_i32_1 = arith.constant 0 : i32
    return %c0_i32, %c0_i32_0 : i32, i32
  }
  func.func @transform_3(%arg0: i32) -> (i32, i32) {
    %c0_i32 = arith.constant 0 : i32
    %c0_i32_0 = arith.constant 0 : i32
    %c0_i32_1 = arith.constant 0 : i32
    return %c0_i32, %c0_i32_0 : i32, i32
  }
  func.func @transform_4(%arg0: i32) -> (i32, i32) {
    %c0_i32 = arith.constant 0 : i32
    %c0_i32_0 = arith.constant 0 : i32
    %c0_i32_1 = arith.constant 0 : i32
    return %c0_i32, %c0_i32_0 : i32, i32
  }
  func.func @transform_5(%arg0: i32) -> (i32, i32) {
    %c0_i32 = arith.constant 0 : i32
    %c0_i32_0 = arith.constant 0 : i32
    return %arg0, %c0_i32 : i32, i32
  }
}

</mosaic_0001>

<llo_original>
// kernel: network_forward.1
$region0: #{network_forward.1}
  #allocation0 [shape = 'u32[]', space=smem, size = 0x4, offset = 0x4, fixed_abs, tag = 'smem constant byte address 0x4 - core index']
  #allocation1 [shape = 'u32[144,128]{1,0:T(1,128)}', space=vmem, size = 0x12000, scoped, tag = 'internal scratch']
  %s0 = inlined_call_operand.vmem [shape: f32[8,64], index: 0, kind: input, shape index: {}]
  %s1 = inlined_call_operand.vmem [shape: bf16[64,32], index: 1, kind: input, shape index: {}]
  %s2 = inlined_call_operand.vmem [shape: f32[1,32], index: 2, kind: input, shape index: {}]
  %s3 = inlined_call_operand.vmem [shape: bf16[32,10], index: 3, kind: input, shape index: {}]
  %s4 = inlined_call_operand.vmem [shape: f32[1,10], index: 4, kind: input, shape index: {}]
  %s5 = inlined_call_operand.hbm [shape: f32[8,10], index: 5, kind: output, shape index: {}]
  %s6 = sld [smem:[#allocation0]]
  $region30: #{network_forward.1} parent=0
    _
  %s8 = ssub.s32 1, %s6
  %s9 = scalar_select 0, %s8, %s6
  $region1: #{network_forward.1} parent=0
    #allocation2 [shape = 'u8[4096]{0}', space=vmem, size = 0x1000, scoped, tag = 'output window, operand 0, single buffered']
    #allocation3 [shape = 's32[1]{0}', space=sflag, size = 0x4, scoped, tag = 'scoped memory for network_forward.1']
    %10 = vsyncpa [#allocation3], 0
    // Predicated region
    $region2: #{network_forward.1} parent=1 // pred_check
      _
    $region3: #{network_forward.1} parent=1 // pred_check_branch
      %12 = sbr.rel (0) target = $region5
    $region4: #{network_forward.1} parent=1 // pred_region
      _
    $region5: #{network_forward.1} parent=1 // pred_fallthru
      _
    // Predicated region
    $region6: #{network_forward.1} parent=1 // pred_check
      _
    $region7: #{network_forward.1} parent=1 // pred_check_branch
      %14 = sbr.rel (0) target = $region9
    $region8: #{network_forward.1} parent=1 // pred_region
      _
    $region9: #{network_forward.1} parent=1 // pred_fallthru
      _
    // Predicated region
    $region10: #{network_forward.1} parent=1 // pred_check
      _
    $region11: #{network_forward.1} parent=1 // pred_check_branch
      %16 = sbr.rel (0) target = $region13
    $region12: #{network_forward.1} parent=1 // pred_region
      _
    $region13: #{network_forward.1} parent=1 // pred_fallthru
      _
    // Predicated region
    $region14: #{network_forward.1} parent=1 // pred_check
      _
    $region15: #{network_forward.1} parent=1 // pred_check_branch
      %18 = sbr.rel (0) target = $region17
    $region16: #{network_forward.1} parent=1 // pred_region
      _
    $region17: #{network_forward.1} parent=1 // pred_fallthru
      _
    // Predicated region
    $region18: #{network_forward.1} parent=1 // pred_check
      _
    $region19: #{network_forward.1} parent=1 // pred_check_branch
      %20 = sbr.rel (0) target = $region21
    $region20: #{network_forward.1} parent=1 // pred_region
      _
    $region21: #{network_forward.1} parent=1 // pred_fallthru
      _
    %v22 = vld [vmem:[%s0] sm:$0xff]
    %v23 = vpack.c.bf16 %v22, %v22
    %v24 = vld [vmem:[%s1] sm:$0xf]
    %v25 = vld [vmem:[%s1 + $0x4] sm:$0xf]
    %v26 = vld [vmem:[%s1 + $0x8] sm:$0xf]
    %v27 = vld [vmem:[%s1 + $0xc] sm:$0xf]
    %v28 = vld [vmem:[%s1 + $0x10] sm:$0xf]
    %v29 = vld [vmem:[%s1 + $0x14] sm:$0xf]
    %v30 = vld [vmem:[%s1 + $0x18] sm:$0xf]
    %v31 = vld [vmem:[%s1 + $0x1c] sm:$0xf]
    %v32 = vld [vmem:[%s2] sm:$0x1]
    %v34 = vlaneseq
    %v35 = vshrl.u32 %v34, 7
    %v36 = vsub.s32 0, %v35
    %v37 = vrot.slane %v32, %v36
    %v47 = vunpack.c.l.b16 %v24
    %v48 = vunpack.c.l.b16 %v25
    %v49 = vunpack.c.l.b16 %v26
    %v50 = vunpack.c.l.b16 %v27
    %v51 = vunpack.c.l.b16 %v28
    %v52 = vunpack.c.l.b16 %v29
    %v53 = vunpack.c.l.b16 %v30
    %v54 = vunpack.c.l.b16 %v31
    %v55 = vpack.c.b16 %v48, %v47
    %v56 = vpack.c.b16 %v50, %v49
    %v57 = vpack.c.b16 %v52, %v51
    %v58 = vpack.c.b16 %v54, %v53
    %vm63 = vcmask 523264
    %v65 = vsel %vm63, %v23, 0
    %67 = vmatprep.subr.bf16.mxu0 0
    %68 = vmatpush1.bf16.msra.mxu0 0
    %69 = vmatprep.subr.bf16.mxu0 0
    %70 = vmatpush1.bf16.msra.mxu0 0
    %71 = vmatprep.subr.bf16.mxu0 0
    %72 = vmatpush1.bf16.msra.mxu0 0
    %73 = vmatprep.subr.bf16.mxu0 0
    %74 = vmatpush1.bf16.msra.mxu0 0
    %75 = vmatprep.subr.bf16.mxu0 0
    %76 = vmatpush1.bf16.msra.mxu0 %v58
    %77 = vmatprep.subr.bf16.mxu0 0
    %78 = vmatpush1.bf16.msra.mxu0 %v57
    %79 = vmatprep.subr.bf16.mxu0 0
    %80 = vmatpush1.bf16.msra.mxu0 %v56
    %81 = vmatprep.subr.bf16.mxu0 0
    %82 = vmatpush1.bf16.msra.mxu0 %v55
    %83 = vmatprep.subr.bf16.mxu0 0
    %84 = vmatpush2.bf16.msra.mxu0 0
    %85 = vmatprep.subr.bf16.mxu0 0
    %86 = vmatpush2.bf16.msra.mxu0 0
    %87 = vmatprep.subr.bf16.mxu0 0
    %88 = vmatpush2.bf16.msra.mxu0 0
    %89 = vmatprep.subr.bf16.mxu0 0
    %90 = vmatpush2.bf16.msra.mxu0 0
    %91 = vmatprep.subr.bf16.mxu0 0
    %92 = vmatpush2.bf16.msra.mxu0 0
    %93 = vmatprep.subr.bf16.mxu0 0
    %94 = vmatpush2.bf16.msra.mxu0 0
    %95 = vmatprep.subr.bf16.mxu0 0
    %96 = vmatpush2.bf16.msra.mxu0 0
    %97 = vmatprep.subr.bf16.mxu0 0
    %98 = vmatpush2.bf16.msra.mxu0 0
    %99 = vmatprep.mubr.bf16.mxu0 0
    %100 = vmatmul.mubr.bf16.gmra.mxu0 %v65
    %v101 = vpop.f32.mrf.mxu0
    %v102 = vadd.f32 %v37, %v101
    %v103 = vpop.f32.mrf.mxu0
    %v104 = vpop.f32.mrf.mxu0
    %v105 = vpop.f32.mrf.mxu0
    %106 = vdwg.mxu0
    %v107 = vmul.f32 %v102, 0.5
    %v108 = vtanh.pop %v107
    %v109 = vmul.f32 %v108, 0.5
    %v110 = vadd.f32 %v109, 0.5
    %v111 = vpack.c.bf16 %v110, %v110
    %v112 = vld [vmem:[%s3] sm:$0xf]
    %v113 = vld [vmem:[%s3 + $0x4] sm:$0xf]
    %v114 = vld [vmem:[%s3 + $0x8] sm:$0xf]
    %v115 = vld [vmem:[%s3 + $0xc] sm:$0xf]
    %v116 = vld [vmem:[%s4] sm:$0x1]
    %v118 = vlaneseq
    %v119 = vshrl.u32 %v118, 7
    %v120 = vsub.s32 0, %v119
    %v121 = vrot.slane %v116, %v120
    %v127 = vunpack.c.l.b16 %v112
    %v128 = vunpack.c.l.b16 %v113
    %v129 = vunpack.c.l.b16 %v114
    %v130 = vunpack.c.l.b16 %v115
    %v131 = vpack.c.b16 %v128, %v127
    %v132 = vpack.c.b16 %v130, %v129
    %vm135 = vcmask 261120
    %v137 = vsel %vm135, %v111, 0
    %139 = vmatprep.subr.bf16.mxu0 0
    %140 = vmatpush1.bf16.msra.mxu0 0
    %141 = vmatprep.subr.bf16.mxu0 0
    %142 = vmatpush1.bf16.msra.mxu0 0
    %143 = vmatprep.subr.bf16.mxu0 0
    %144 = vmatpush1.bf16.msra.mxu0 0
    %145 = vmatprep.subr.bf16.mxu0 0
    %146 = vmatpush1.bf16.msra.mxu0 0
    %147 = vmatprep.subr.bf16.mxu0 0
    %148 = vmatpush1.bf16.msra.mxu0 0
    %149 = vmatprep.subr.bf16.mxu0 0
    %150 = vmatpush1.bf16.msra.mxu0 0
    %151 = vmatprep.subr.bf16.mxu0 0
    %152 = vmatpush1.bf16.msra.mxu0 %v132
    %153 = vmatprep.subr.bf16.mxu0 0
    %154 = vmatpush1.bf16.msra.mxu0 %v131
    %155 = vmatprep.subr.bf16.mxu0 0
    %156 = vmatpush2.bf16.msra.mxu0 0
    %157 = vmatprep.subr.bf16.mxu0 0
    %158 = vmatpush2.bf16.msra.mxu0 0
    %159 = vmatprep.subr.bf16.mxu0 0
    %160 = vmatpush2.bf16.msra.mxu0 0
    %161 = vmatprep.subr.bf16.mxu0 0
    %162 = vmatpush2.bf16.msra.mxu0 0
    %163 = vmatprep.subr.bf16.mxu0 0
    %164 = vmatpush2.bf16.msra.mxu0 0
    %165 = vmatprep.subr.bf16.mxu0 0
    %166 = vmatpush2.bf16.msra.mxu0 0
    %167 = vmatprep.subr.bf16.mxu0 0
    %168 = vmatpush2.bf16.msra.mxu0 0
    %169 = vmatprep.subr.bf16.mxu0 0
    %170 = vmatpush2.bf16.msra.mxu0 0
    %171 = vmatprep.mubr.bf16.mxu0 0
    %172 = vmatmul.mubr.bf16.gmra.mxu0 %v137
    %v173 = vpop.f32.mrf.mxu0
    %v174 = vadd.f32 %v121, %v173
    %v175 = vpop.f32.mrf.mxu0
    %v176 = vpop.f32.mrf.mxu0
    %v177 = vpop.f32.mrf.mxu0
    %178 = vdwg.mxu0
    %vm179 = vcmask 80896
    %180 = vst.msk [vmem:[#allocation2] sm:$0xff] %vm179, %v174
    // Predicated region
    $region22: #{network_forward.1} parent=1 // pred_check
      _
    $region23: #{network_forward.1} parent=1 // pred_check_branch
      %182 = sbr.rel (0) target = $region25
    $region24: #{network_forward.1} parent=1 // pred_region
      %s184 = ssub.s32 128, 128
      %185 = vsyncadd [#allocation3], %s184
      %s187 = sshll.u32 [#allocation2], 4
      %s188 = int_to_ptr.vmem [resolvable:$true] %s187
      %190 = dma.vmem_to_hbm [thread:$0]  %s188, 128, %s5, [#allocation3]
    $region25: #{network_forward.1} parent=1 // pred_fallthru
      _
    // Predicated region
    $region26: #{network_forward.1} parent=1 // pred_check
      _
    $region27: #{network_forward.1} parent=1 // pred_check_branch
      %192 = sbr.rel (0) target = $region29
    $region28: #{network_forward.1} parent=1 // pred_region
      %193 = dma.done [#allocation3], 128
    $region29: #{network_forward.1} parent=1 // pred_fallthru
      _
    %194 = vsyncpa [#allocation3], 1

</llo_original>
